<compile_context>
chip_gen: v6e
topology: v6e:2x2x1
jax: 0.10.0
libtpu: 0.0.40
codegen_flags: <defaults>
</compile_context>

<pallas_src>
import jax
import jax.numpy as jnp
from jax.experimental import pallas as pl
from jax.experimental.pallas import tpu as pltpu


def _flowseg_kernel(mask_ref, flow_ref, out_ref):
    """One grid step over TB batch items.

    mask_ref: (TB, HW)      float logits
    flow_ref: (TB, C*HW)    float, channel c in lane slice [c*HW, (c+1)*HW)
    out_ref : (1, 8, 128)   f32; row 0 lanes 0..3 = [pos_sum, pos_cnt,
                                                     neg_sum, neg_cnt]
    """
    tb, hw = mask_ref.shape
    c_dim = flow_ref.shape[1] // hw

    mask = mask_ref[...].astype(jnp.float32)                # (TB, HW)

    # Per-(batch, channel) spatial mean (lane reduce), center, square, and
    # accumulate the channel sum with plain VALU adds over statically sliced
    # dense planes (no sublane padding, no XLU relayout, no sqrt).
    normsq = None
    for c in range(c_dim):
        ch = flow_ref[:, pl.ds(c * hw, hw)].astype(jnp.float32)   # (TB, HW)
        cen = ch - jnp.mean(ch, axis=-1, keepdims=True)
        sq = cen * cen
        normsq = sq if normsq is None else normsq + sq
    nmaxsq = jnp.max(normsq, axis=-1, keepdims=True)        # (TB, 1)

    # norm > 0.8*nmax  <=>  norm^2 > 0.64*nmax^2 (monotone, avoids the sqrt).
    pos = normsq > nmaxsq * 0.64
    neg = normsq < nmaxsq * 0.04

    # BCEWithLogits(x, 1) = softplus(-x) = max(-x, 0) + log1p(exp(-|x|))
    # BCEWithLogits(x, 0) = softplus( x) = max( x, 0) + log1p(exp(-|x|))
    # One shared EUP exp/log1p; each branch is directly stable.
    t = jnp.log1p(jnp.exp(-jnp.abs(mask)))
    bce_pos = jnp.maximum(-mask, 0.0) + t
    bce_neg = jnp.maximum(mask, 0.0) + t

    pos_sum = jnp.sum(jnp.where(pos, bce_pos, 0.0))
    pos_cnt = jnp.sum(jnp.where(pos, 1.0, 0.0))
    neg_sum = jnp.sum(jnp.where(neg, bce_neg, 0.0))
    neg_cnt = jnp.sum(jnp.where(neg, 1.0, 0.0))

    # Pack the four partials into row 0, lanes 0..3 of a lane-dense (8, 128)
    # tile; everything else is zero so the host-side combine is a plain sum.
    row = jax.lax.broadcasted_iota(jnp.int32, (8, 128), 0)
    lane = jax.lax.broadcasted_iota(jnp.int32, (8, 128), 1)
    vals = jnp.where(lane == 0, pos_sum,
           jnp.where(lane == 1, pos_cnt,
           jnp.where(lane == 2, neg_sum,
           jnp.where(lane == 3, neg_cnt, 0.0))))
    out_ref[...] = jnp.where(row == 0, vals, 0.0).reshape(1, 8, 128)


def _sublane_multiple(itemsize):
    # (8,128) tiling: second-minor block dim must be a multiple of 8 for 32-bit,
    # 16 for 16-bit, 32 for 8-bit (or equal the full array dim).
    return {4: 8, 2: 16, 1: 32}.get(int(itemsize), 8)


def flow_seg_val_loss(masks, flows, w_neg=1.0, block_batch=None):
    """masks: (B, H, W) float logits; flows: (B, C, H, W) float. Returns f32."""
    B, H, W = masks.shape
    Bf, C, Hf, Wf = flows.shape
    assert (B, H, W) == (Bf, Hf, Wf)
    HW = H * W

    # Lane-dense, padding-free layout.  Both reshapes are free (row-major
    # contiguity preserved) -- no wrapper transpose, no extra HBM pass.
    masks2 = masks.reshape(B, HW)
    flows2 = flows.reshape(B, C * HW)

    m_isz = masks2.dtype.itemsize
    f_isz = flows2.dtype.itemsize
    sub = max(_sublane_multiple(m_isz), _sublane_multiple(f_isz))

    # Per-generation VMEM sizing.
    try:
        vmem_cap = int(pltpu.get_tpu_info().vmem_capacity_bytes)
    except Exception:
        vmem_cap = 64 * 2**20                       # conservative: v7x per-TC
    if vmem_cap >= 100 * 2**20:                     # v5e / v6e: 128 MiB VMEM
        budget = 24 * 2**20                         # double-buffered input bytes
        limit_cap = 96 * 2**20
    else:                                           # v7x: 64 MiB per TensorCore
        budget = 10 * 2**20
        limit_cap = 56 * 2**20

    # Double-buffered input bytes per batch item.  The layout is dense, so this
    # accounting matches what Mosaic actually allocates (no sublane padding).
    per_batch = 2 * (C * HW * f_isz + HW * m_isz)

    if block_batch is None:
        valid = [d for d in range(1, B + 1)
                 if B % d == 0 and (d == B or d % sub == 0)]
        fitting = [d for d in valid if d * per_batch <= budget]
        # Prefer >= 2 grid steps: with dimension_semantics=("parallel",) the
        # batch grid axis is what gets sharded across v7x's two TensorCores;
        # G == 1 would forfeit half its HBM bandwidth.  Near-free on v5e/v6e.
        multi = [d for d in fitting if B // d >= 2]
        if multi:
            block_batch = max(multi)
        elif fitting:
            block_batch = max(fitting)
        else:
            # TODO(synk): two-pass spatial tiling (pass 1: per-(b,c) mean and
            # per-b max of norm^2 over an "arbitrary" HW grid axis; pass 2:
            # thresholds + BCE partial sums) for multi-megapixel HW where even
            # a single batch item exceeds the VMEM budget.
            block_batch = min(valid)
    tb = block_batch
    assert B % tb == 0 and (tb == B or tb % sub == 0)
    G = B // tb

    dbl_block_bytes = tb * per_batch
    vmem_limit = int(min(limit_cap,
                         max(16 * 2**20, int(1.5 * dbl_block_bytes) + (2 << 20))))

    partials = pl.pallas_call(
        _flowseg_kernel,
        out_shape=jax.ShapeDtypeStruct((G, 8, 128), jnp.float32),
        grid_spec=pltpu.PrefetchScalarGridSpec(
            num_scalar_prefetch=0,
            grid=(G,),
            in_specs=[
                pl.BlockSpec((tb, HW), lambda g: (g, 0)),         # masks
                pl.BlockSpec((tb, C * HW), lambda g: (g, 0)),     # flows (chan-dense)
            ],
            out_specs=pl.BlockSpec((1, 8, 128), lambda g: (g, 0, 0)),
        ),
        compiler_params=pltpu.CompilerParams(
            dimension_semantics=("parallel",),     # no cross-step carry
            vmem_limit_bytes=vmem_limit),
    )(masks2, flows2)

    # Global combine (matches PyTorch: sums/counts over the whole batch, then a
    # single ratio per class).  NaN when a class selects zero pixels, same as
    # torch's mean over an empty selection.
    p = jnp.sum(partials, axis=(0, 1))             # (128,) — lanes 0..3 nonzero
    pos_loss = p[0] / p[1]
    neg_loss = p[2] / p[3]
    return pos_loss + jnp.float32(w_neg) * neg_loss


def _softplus(x):
    return jnp.maximum(x, 0.0) + jnp.log1p(jnp.exp(-jnp.abs(x)))


def _reference_loss(masks, flows, w_neg=1.0):
    """Plain-JAX reference mirroring the PyTorch module."""
    fm = jnp.mean(flows, axis=(2, 3), keepdims=True)
    cen = flows - fm
    norm = jnp.sqrt(jnp.sum(cen * cen, axis=1))                        # (B,H,W)
    nmax = jnp.max(norm.reshape(norm.shape[0], -1), axis=1)[:, None, None]
    pos = norm > nmax * 0.8
    neg = norm < nmax * 0.2
    pos_loss = jnp.sum(jnp.where(pos, _softplus(-masks), 0.0)) / jnp.sum(pos)
    neg_loss = jnp.sum(jnp.where(neg, _softplus(masks), 0.0)) / jnp.sum(neg)
    return pos_loss + w_neg * neg_loss


if __name__ == "__main__":
    B, C, H, W = 2, 2, 16, 16
    key = jax.random.PRNGKey(0)
    k_mask, k_flow = jax.random.split(key)
    masks = jax.random.normal(k_mask, (B, H, W), dtype=jnp.float32)
    flows = jax.random.normal(k_flow, (B, C, H, W), dtype=jnp.float32)

    loss = flow_seg_val_loss(masks, flows, w_neg=1.0)
    loss = jax.block_until_ready(loss)

    ref = _reference_loss(masks, flows, w_neg=1.0)
    assert jnp.allclose(loss, ref, rtol=1e-5, atol=1e-5), (loss, ref)

    print("KERNEL_OK")
</pallas_src>

<mosaic_0001>
module attributes {stable_mosaic.version = 11 : i64} {
  func.func @_flowseg_kernel(%arg0: i32, %arg1: memref<2x256xf32, #tpu.memory_space<vmem>>, %arg2: memref<2x512xf32, #tpu.memory_space<vmem>>, %arg3: memref<1x8x128xf32, #tpu.memory_space<vmem>>) attributes {dimension_semantics = [#tpu.dimension_semantics<parallel>], iteration_bounds = array<i64: 1>, scalar_prefetch = 0 : i64, scratch_operands = 0 : i64, tpu.core_type = #tpu.core_type<tc>, window_params = [{transform_indices = @transform_0, window_bounds = array<i64: 2, 256>}, {transform_indices = @transform_1, window_bounds = array<i64: 2, 512>}, {transform_indices = @transform_2, window_bounds = array<i64: 1, 8, 128>}]} {
    %c0 = arith.constant 0 : index
    %c0_0 = arith.constant 0 : index
    %0 = vector.load %arg1[%c0, %c0_0] : memref<2x256xf32, #tpu.memory_space<vmem>>, vector<2x256xf32>
    %c0_1 = arith.constant 0 : index
    %c0_2 = arith.constant 0 : index
    %1 = vector.load %arg2[%c0_1, %c0_2] : memref<2x512xf32, #tpu.memory_space<vmem>>, vector<2x256xf32>
    %cst = arith.constant dense<0.000000e+00> : vector<2xf32>
    %2 = vector.multi_reduction <add>, %1, %cst [1] : vector<2x256xf32> to vector<2xf32>
    %3 = vector.shape_cast %2 : vector<2xf32> to vector<2x1xf32>
    %cst_3 = arith.constant 2.560000e+02 : f32
    %4 = vector.broadcast %cst_3 : f32 to vector<2x1xf32>
    %5 = arith.divf %3, %4 : vector<2x1xf32>
    %6 = vector.broadcast %5 : vector<2x1xf32> to vector<2x256xf32>
    %7 = arith.subf %1, %6 : vector<2x256xf32>
    %8 = arith.mulf %7, %7 : vector<2x256xf32>
    %c0_4 = arith.constant 0 : index
    %c256 = arith.constant 256 : index
    %9 = vector.load %arg2[%c0_4, %c256] : memref<2x512xf32, #tpu.memory_space<vmem>>, vector<2x256xf32>
    %cst_5 = arith.constant dense<0.000000e+00> : vector<2xf32>
    %10 = vector.multi_reduction <add>, %9, %cst_5 [1] : vector<2x256xf32> to vector<2xf32>
    %11 = vector.shape_cast %10 : vector<2xf32> to vector<2x1xf32>
    %cst_6 = arith.constant 2.560000e+02 : f32
    %12 = vector.broadcast %cst_6 : f32 to vector<2x1xf32>
    %13 = arith.divf %11, %12 : vector<2x1xf32>
    %14 = vector.broadcast %13 : vector<2x1xf32> to vector<2x256xf32>
    %15 = arith.subf %9, %14 : vector<2x256xf32>
    %16 = arith.mulf %15, %15 : vector<2x256xf32>
    %17 = arith.addf %8, %16 : vector<2x256xf32>
    %cst_7 = arith.constant dense<0xFF800000> : vector<2xf32>
    %18 = vector.multi_reduction <maximumf>, %17, %cst_7 [1] : vector<2x256xf32> to vector<2xf32>
    %19 = vector.shape_cast %18 : vector<2xf32> to vector<2x1xf32>
    %cst_8 = arith.constant 6.400000e-01 : f32
    %20 = vector.broadcast %cst_8 : f32 to vector<2x1xf32>
    %21 = arith.mulf %19, %20 : vector<2x1xf32>
    %22 = vector.broadcast %21 : vector<2x1xf32> to vector<2x256xf32>
    %23 = arith.cmpf ogt, %17, %22 : vector<2x256xf32>
    %cst_9 = arith.constant 4.000000e-02 : f32
    %24 = vector.broadcast %cst_9 : f32 to vector<2x1xf32>
    %25 = arith.mulf %19, %24 : vector<2x1xf32>
    %26 = vector.broadcast %25 : vector<2x1xf32> to vector<2x256xf32>
    %27 = arith.cmpf olt, %17, %26 : vector<2x256xf32>
    %28 = math.absf %0 : vector<2x256xf32>
    %cst_10 = arith.constant 0.000000e+00 : f32
    %29 = vector.broadcast %cst_10 : f32 to vector<2x256xf32>
    %30 = arith.subf %29, %28 : vector<2x256xf32>
    %31 = math.exp %30 : vector<2x256xf32>
    %32 = math.log1p %31 : vector<2x256xf32>
    %cst_11 = arith.constant 0.000000e+00 : f32
    %33 = vector.broadcast %cst_11 : f32 to vector<2x256xf32>
    %34 = arith.subf %33, %0 : vector<2x256xf32>
    %cst_12 = arith.constant 0.000000e+00 : f32
    %35 = vector.broadcast %cst_12 : f32 to vector<2x256xf32>
    %36 = arith.maximumf %34, %35 : vector<2x256xf32>
    %37 = arith.addf %36, %32 : vector<2x256xf32>
    %cst_13 = arith.constant 0.000000e+00 : f32
    %38 = vector.broadcast %cst_13 : f32 to vector<2x256xf32>
    %39 = arith.maximumf %0, %38 : vector<2x256xf32>
    %40 = arith.addf %39, %32 : vector<2x256xf32>
    %cst_14 = arith.constant 0.000000e+00 : f32
    %41 = vector.broadcast %cst_14 : f32 to vector<2x256xf32>
    %42 = arith.select %23, %37, %41 : vector<2x256xi1>, vector<2x256xf32>
    %43 = vector.shape_cast %42 : vector<2x256xf32> to vector<1x2x256xf32>
    %cst_15 = arith.constant dense<0.000000e+00> : vector<1xf32>
    %44 = vector.multi_reduction <add>, %43, %cst_15 [1, 2] : vector<1x2x256xf32> to vector<1xf32>
    %45 = vector.shape_cast %44 : vector<1xf32> to vector<1x1x1xf32>
    %46 = vector.extract %45[0, 0, 0] : f32 from vector<1x1x1xf32>
    %cst_16 = arith.constant 1.000000e+00 : f32
    %cst_17 = arith.constant 0.000000e+00 : f32
    %47 = vector.broadcast %cst_16 : f32 to vector<2x256xf32>
    %48 = vector.broadcast %cst_17 : f32 to vector<2x256xf32>
    %49 = arith.select %23, %47, %48 : vector<2x256xi1>, vector<2x256xf32>
    %50 = vector.shape_cast %49 : vector<2x256xf32> to vector<1x2x256xf32>
    %cst_18 = arith.constant dense<0.000000e+00> : vector<1xf32>
    %51 = vector.multi_reduction <add>, %50, %cst_18 [1, 2] : vector<1x2x256xf32> to vector<1xf32>
    %52 = vector.shape_cast %51 : vector<1xf32> to vector<1x1x1xf32>
    %53 = vector.extract %52[0, 0, 0] : f32 from vector<1x1x1xf32>
    %cst_19 = arith.constant 0.000000e+00 : f32
    %54 = vector.broadcast %cst_19 : f32 to vector<2x256xf32>
    %55 = arith.select %27, %40, %54 : vector<2x256xi1>, vector<2x256xf32>
    %56 = vector.shape_cast %55 : vector<2x256xf32> to vector<1x2x256xf32>
    %cst_20 = arith.constant dense<0.000000e+00> : vector<1xf32>
    %57 = vector.multi_reduction <add>, %56, %cst_20 [1, 2] : vector<1x2x256xf32> to vector<1xf32>
    %58 = vector.shape_cast %57 : vector<1xf32> to vector<1x1x1xf32>
    %59 = vector.extract %58[0, 0, 0] : f32 from vector<1x1x1xf32>
    %cst_21 = arith.constant 1.000000e+00 : f32
    %cst_22 = arith.constant 0.000000e+00 : f32
    %60 = vector.broadcast %cst_21 : f32 to vector<2x256xf32>
    %61 = vector.broadcast %cst_22 : f32 to vector<2x256xf32>
    %62 = arith.select %27, %60, %61 : vector<2x256xi1>, vector<2x256xf32>
    %63 = vector.shape_cast %62 : vector<2x256xf32> to vector<1x2x256xf32>
    %cst_23 = arith.constant dense<0.000000e+00> : vector<1xf32>
    %64 = vector.multi_reduction <add>, %63, %cst_23 [1, 2] : vector<1x2x256xf32> to vector<1xf32>
    %65 = vector.shape_cast %64 : vector<1xf32> to vector<1x1x1xf32>
    %66 = vector.extract %65[0, 0, 0] : f32 from vector<1x1x1xf32>
    %67 = tpu.iota {dimensions = array<i32: 0>} : vector<8x128xi32>
    %68 = tpu.iota {dimensions = array<i32: 1>} : vector<8x128xi32>
    %c0_i32 = arith.constant 0 : i32
    %69 = vector.broadcast %c0_i32 : i32 to vector<8x128xi32>
    %70 = arith.cmpi eq, %68, %69 : vector<8x128xi32>
    %c1_i32 = arith.constant 1 : i32
    %71 = vector.broadcast %c1_i32 : i32 to vector<8x128xi32>
    %72 = arith.cmpi eq, %68, %71 : vector<8x128xi32>
    %c2_i32 = arith.constant 2 : i32
    %73 = vector.broadcast %c2_i32 : i32 to vector<8x128xi32>
    %74 = arith.cmpi eq, %68, %73 : vector<8x128xi32>
    %c3_i32 = arith.constant 3 : i32
    %75 = vector.broadcast %c3_i32 : i32 to vector<8x128xi32>
    %76 = arith.cmpi eq, %68, %75 : vector<8x128xi32>
    %cst_24 = arith.constant 0.000000e+00 : f32
    %77 = vector.broadcast %66 : f32 to vector<8x128xf32>
    %78 = vector.broadcast %cst_24 : f32 to vector<8x128xf32>
    %79 = arith.select %76, %77, %78 : vector<8x128xi1>, vector<8x128xf32>
    %80 = vector.broadcast %59 : f32 to vector<8x128xf32>
    %81 = arith.select %74, %80, %79 : vector<8x128xi1>, vector<8x128xf32>
    %82 = vector.broadcast %53 : f32 to vector<8x128xf32>
    %83 = arith.select %72, %82, %81 : vector<8x128xi1>, vector<8x128xf32>
    %84 = vector.broadcast %46 : f32 to vector<8x128xf32>
    %85 = arith.select %70, %84, %83 : vector<8x128xi1>, vector<8x128xf32>
    %c0_i32_25 = arith.constant 0 : i32
    %86 = vector.broadcast %c0_i32_25 : i32 to vector<8x128xi32>
    %87 = arith.cmpi eq, %67, %86 : vector<8x128xi32>
    %cst_26 = arith.constant 0.000000e+00 : f32
    %88 = vector.broadcast %cst_26 : f32 to vector<8x128xf32>
    %89 = arith.select %87, %85, %88 : vector<8x128xi1>, vector<8x128xf32>
    %90 = vector.shape_cast %89 : vector<8x128xf32> to vector<1x8x128xf32>
    %c0_27 = arith.constant 0 : index
    %c0_28 = arith.constant 0 : index
    %c0_29 = arith.constant 0 : index
    %91 = vector.load %arg3[%c0_27, %c0_28, %c0_29] : memref<1x8x128xf32, #tpu.memory_space<vmem>>, vector<1x8x128xf32>
    tpu.vector_store %arg3[%c0_27, %c0_28, %c0_29], %90 {strides = array<i32>} : memref<1x8x128xf32, #tpu.memory_space<vmem>>, vector<1x8x128xf32>,
    return
  }
  func.func @transform_0(%arg0: i32) -> (i32, i32) {
    %c0_i32 = arith.constant 0 : i32
    %c0_i32_0 = arith.constant 0 : i32
    return %arg0, %c0_i32 : i32, i32
  }
  func.func @transform_1(%arg0: i32) -> (i32, i32) {
    %c0_i32 = arith.constant 0 : i32
    %c0_i32_0 = arith.constant 0 : i32
    return %arg0, %c0_i32 : i32, i32
  }
  func.func @transform_2(%arg0: i32) -> (i32, i32, i32) {
    %c0_i32 = arith.constant 0 : i32
    %c0_i32_0 = arith.constant 0 : i32
    %c0_i32_1 = arith.constant 0 : i32
    return %arg0, %c0_i32, %c0_i32_0 : i32, i32, i32
  }
}

</mosaic_0001>

<llo_original>
// kernel: tpu_custom_call.1
$region0: #{tpu_custom_call.1}
  #allocation0 [shape = 'u32[]', space=smem, size = 0x4, offset = 0x4, fixed_abs, tag = 'smem constant byte address 0x4 - core index']
  #allocation1 [shape = 'u32[144,128]{1,0:T(1,128)}', space=vmem, size = 0x12000, scoped, tag = 'internal scratch']
  %s0 = inlined_call_operand.hbm [shape: f32[2,256], index: 0, kind: input, shape index: {}]
  %s1 = inlined_call_operand.hbm [shape: f32[2,512], index: 1, kind: input, shape index: {}]
  %s2 = inlined_call_operand.hbm [shape: f32[1,8,128], index: 2, kind: output, shape index: {}]
  %s3 = sld [smem:[#allocation0]]
  $region26: #{tpu_custom_call.1} parent=0
    _
  %s5 = ssub.s32 1, %s3
  %s6 = scalar_select 0, %s5, %s3
  $region1: #{tpu_custom_call.1} parent=0
    #allocation2 [shape = 'u8[2048]{0}', space=vmem, size = 0x800, scoped, tag = 'input window, operand 0, single buffered']
    #allocation3 [shape = 's32[1]{0}', space=sflag, size = 0x4, scoped, tag = 'scoped memory for tpu_custom_call.1']
    #allocation4 [shape = 's32[1]{0}', space=sflag, size = 0x4, scoped, tag = 'scoped memory for tpu_custom_call.1']
    #allocation5 [shape = 'u8[4096]{0}', space=vmem, size = 0x1000, scoped, tag = 'input window, operand 1, single buffered']
    #allocation6 [shape = 's32[1]{0}', space=sflag, size = 0x4, scoped, tag = 'scoped memory for tpu_custom_call.1']
    #allocation7 [shape = 'u8[4096]{0}', space=vmem, size = 0x1000, scoped, tag = 'output window, operand 0, single buffered']
    %7 = vsyncpa [#allocation3], 0
    %8 = vsyncpa [#allocation6], 0
    %9 = vsyncpa [#allocation4], 0
    // Predicated region
    $region2: #{tpu_custom_call.1} parent=1 // pred_check
      _
    $region3: #{tpu_custom_call.1} parent=1 // pred_check_branch
      %11 = sbr.rel (0) target = $region5
    $region4: #{tpu_custom_call.1} parent=1 // pred_region
      %s13 = ssub.s32 64, 64
      %14 = vsyncadd [#allocation3], %s13
      %s16 = sshll.u32 [#allocation2], 4
      %s17 = int_to_ptr.vmem [resolvable:$true] %s16
      %19 = dma.hbm_to_vmem [thread:$0]  %s0, 64, %s17, [#allocation3]
    $region5: #{tpu_custom_call.1} parent=1 // pred_fallthru
      _
    // Predicated region
    $region6: #{tpu_custom_call.1} parent=1 // pred_check
      _
    $region7: #{tpu_custom_call.1} parent=1 // pred_check_branch
      %21 = sbr.rel (0) target = $region9
    $region8: #{tpu_custom_call.1} parent=1 // pred_region
      %s23 = ssub.s32 128, 128
      %24 = vsyncadd [#allocation6], %s23
      %s26 = sshll.u32 [#allocation5], 4
      %s27 = int_to_ptr.vmem [resolvable:$true] %s26
      %29 = dma.hbm_to_vmem [thread:$0]  %s1, 128, %s27, [#allocation6]
    $region9: #{tpu_custom_call.1} parent=1 // pred_fallthru
      _
    // Predicated region
    $region10: #{tpu_custom_call.1} parent=1 // pred_check
      _
    $region11: #{tpu_custom_call.1} parent=1 // pred_check_branch
      %31 = sbr.rel (0) target = $region13
    $region12: #{tpu_custom_call.1} parent=1 // pred_region
      %32 = dma.done [#allocation3], 64
    $region13: #{tpu_custom_call.1} parent=1 // pred_fallthru
      _
    // Predicated region
    $region14: #{tpu_custom_call.1} parent=1 // pred_check
      _
    $region15: #{tpu_custom_call.1} parent=1 // pred_check_branch
      %34 = sbr.rel (0) target = $region17
    $region16: #{tpu_custom_call.1} parent=1 // pred_region
      %35 = dma.done [#allocation6], 128
    $region17: #{tpu_custom_call.1} parent=1 // pred_fallthru
      _
    %v36 = vld [vmem:[#allocation2] sm:$0xf]
    %v37 = vld [vmem:[#allocation5] sm:$0xf]
    %v40 = vunpack.c.l.s4 1983009808
    %v41 = vunpack.c.0.s8 %v40
    %v42 = vlaneseq
    %v43 = vshrl.u32 %v42, 7
    %v44 = vsub.s32 %v41, %v43
    %v45 = vrot.slane %v37, %v44
    %v46 = vcombine.high %v45, %v45
    %vm49 = vcmask 1041408
    %v50 = vsel %vm49, %v45, 0.0
    %v51 = vsel %vm49, %v46, 0.0
    %v52 = vadd.f32 %v50, %v51
    %53 = vadd.xlane.f32.xlu0 %v52
    %v54 = vpop.xlane.xlu0 %53
    %v55 = vrcp.pop 256.0
    %v56 = vmul.f32 %v54, %v55
    %v59 = vunpack.c.l.s4 269488144
    %v60 = vunpack.c.0.s8 %v59
    %v61 = vlaneseq
    %v62 = vshrl.u32 %v61, 7
    %v63 = vsub.s32 %v60, %v62
    %v64 = vrot.slane %v56, %v63
    %v66 = vsub.f32 %v37, %v64
    %v67 = vmul.f32 %v66, %v66
    %v68 = vld [vmem:[#allocation5 + $0x4] sm:$0xf]
    %v71 = vunpack.c.l.s4 1983009808
    %v72 = vunpack.c.0.s8 %v71
    %v73 = vlaneseq
    %v74 = vshrl.u32 %v73, 7
    %v75 = vsub.s32 %v72, %v74
    %v76 = vrot.slane %v68, %v75
    %v77 = vcombine.high %v76, %v76
    %v80 = vsel %vm49, %v76, 0.0
    %v81 = vsel %vm49, %v77, 0.0
    %v82 = vadd.f32 %v80, %v81
    %83 = vadd.xlane.f32.xlu0 %v82
    %v84 = vpop.xlane.xlu0 %83
    %v85 = vmul.f32 %v84, %v55
    %v88 = vunpack.c.l.s4 269488144
    %v89 = vunpack.c.0.s8 %v88
    %v90 = vlaneseq
    %v91 = vshrl.u32 %v90, 7
    %v92 = vsub.s32 %v89, %v91
    %v93 = vrot.slane %v85, %v92
    %v95 = vsub.f32 %v68, %v93
    %v96 = vmul.f32 %v95, %v95
    %v97 = vadd.f32 %v67, %v96
    %v100 = vunpack.c.l.s4 1983009808
    %v101 = vunpack.c.0.s8 %v100
    %v102 = vlaneseq
    %v103 = vshrl.u32 %v102, 7
    %v104 = vsub.s32 %v101, %v103
    %v105 = vrot.slane %v97, %v104
    %v106 = vcombine.high %v105, %v105
    %v109 = vsel %vm49, %v105, -inf
    %v110 = vsel %vm49, %v106, -inf
    %v111 = vmax.f32 %v109, %v110
    %112 = vmax.xlane.f32.xlu0 %v111
    %v113 = vpop.xlane.xlu0 %112
    %v114 = vmul.f32 %v113, 0.64
    %v117 = vunpack.c.l.s4 269488144
    %v118 = vunpack.c.0.s8 %v117
    %v119 = vlaneseq
    %v120 = vshrl.u32 %v119, 7
    %v121 = vsub.s32 %v118, %v120
    %v122 = vrot.slane %v114, %v121
    %vm124 = vcmp.gt.f32.partialorder %v97, %v122
    %v125 = vmul.f32 %v113, 0.04
    %v128 = vunpack.c.l.s4 269488144
    %v129 = vunpack.c.0.s8 %v128
    %v130 = vlaneseq
    %v131 = vshrl.u32 %v130, 7
    %v132 = vsub.s32 %v129, %v131
    %v133 = vrot.slane %v125, %v132
    %vm135 = vcmp.lt.f32.partialorder %v97, %v133
    %v136 = vand.u32 2147483647, %v36
    %v137 = vsub.f32 0.0, %v136
    %v138 = vmul.f32 %v137, 1.442695
    %v139 = vpow.pop %v138
    %v140 = vadd.f32 %v139, 1.0
    %v141 = vlog2.pop %v140
    %v142 = vmul.f32 %v141, 0.6931472
    %v143 = vmul.f32 -0.5, %v139
    %v144 = vadd.f32 %v143, 1.0
    %v145 = vmul.f32 %v144, %v139
    %v146 = vand.u32 2147483647, %v139
    %vm147 = vcmp.lt.f32.partialorder %v146, 0.0004427343
    %v148 = vsel %vm147, %v145, %v142
    %v149 = vsub.f32 0.0, %v36
    %v150 = vmax.f32 %v149, 0.0
    %v151 = vadd.f32 %v150, %v148
    %v152 = vmax.f32 %v36, 0.0
    %v153 = vadd.f32 %v152, %v148
    %v154 = vsel %vm124, %v151, 0.0
    %v157 = vunpack.c.l.s4 1983009808
    %v158 = vunpack.c.0.s8 %v157
    %v159 = vlaneseq
    %v160 = vshrl.u32 %v159, 7
    %v161 = vsub.s32 %v158, %v160
    %v162 = vrot.slane %v154, %v161
    %v163 = vcombine.high %v162, %v162
    %v166 = vsel %vm49, %v162, 0.0
    %v167 = vsel %vm49, %v163, 0.0
    %v168 = vadd.f32 %v166, %v167
    %169 = vadd.xlane.f32.xlu0 %v168
    %v170 = vpop.xlane.xlu0 %169
    %v171 = vrot.slane %v170, 4
    %v172 = vadd.f32 %v170, %v171
    %v173 = vrot.slane %v172, 2
    %v174 = vadd.f32 %v172, %v173
    %v175 = vrot.slane %v174, 1
    %v176 = vadd.f32 %v174, %v175
    %s177 = vtos %v176
    %v178 = vsel %vm124, 1.0, 0.0
    %v181 = vunpack.c.l.s4 1983009808
    %v182 = vunpack.c.0.s8 %v181
    %v183 = vlaneseq
    %v184 = vshrl.u32 %v183, 7
    %v185 = vsub.s32 %v182, %v184
    %v186 = vrot.slane %v178, %v185
    %v187 = vcombine.high %v186, %v186
    %v190 = vsel %vm49, %v186, 0.0
    %v191 = vsel %vm49, %v187, 0.0
    %v192 = vadd.f32 %v190, %v191
    %193 = vadd.xlane.f32.xlu0 %v192
    %v194 = vpop.xlane.xlu0 %193
    %v195 = vrot.slane %v194, 4
    %v196 = vadd.f32 %v194, %v195
    %v197 = vrot.slane %v196, 2
    %v198 = vadd.f32 %v196, %v197
    %v199 = vrot.slane %v198, 1
    %v200 = vadd.f32 %v198, %v199
    %s201 = vtos %v200
    %v202 = vsel %vm135, %v153, 0.0
    %v205 = vunpack.c.l.s4 1983009808
    %v206 = vunpack.c.0.s8 %v205
    %v207 = vlaneseq
    %v208 = vshrl.u32 %v207, 7
    %v209 = vsub.s32 %v206, %v208
    %v210 = vrot.slane %v202, %v209
    %v211 = vcombine.high %v210, %v210
    %v214 = vsel %vm49, %v210, 0.0
    %v215 = vsel %vm49, %v211, 0.0
    %v216 = vadd.f32 %v214, %v215
    %217 = vadd.xlane.f32.xlu0 %v216
    %v218 = vpop.xlane.xlu0 %217
    %v219 = vrot.slane %v218, 4
    %v220 = vadd.f32 %v218, %v219
    %v221 = vrot.slane %v220, 2
    %v222 = vadd.f32 %v220, %v221
    %v223 = vrot.slane %v222, 1
    %v224 = vadd.f32 %v222, %v223
    %s225 = vtos %v224
    %v226 = vsel %vm135, 1.0, 0.0
    %v229 = vunpack.c.l.s4 1983009808
    %v230 = vunpack.c.0.s8 %v229
    %v231 = vlaneseq
    %v232 = vshrl.u32 %v231, 7
    %v233 = vsub.s32 %v230, %v232
    %v234 = vrot.slane %v226, %v233
    %v235 = vcombine.high %v234, %v234
    %v238 = vsel %vm49, %v234, 0.0
    %v239 = vsel %vm49, %v235, 0.0
    %v240 = vadd.f32 %v238, %v239
    %241 = vadd.xlane.f32.xlu0 %v240
    %v242 = vpop.xlane.xlu0 %241
    %v243 = vrot.slane %v242, 4
    %v244 = vadd.f32 %v242, %v243
    %v245 = vrot.slane %v244, 2
    %v246 = vadd.f32 %v244, %v245
    %v247 = vrot.slane %v246, 1
    %v248 = vadd.f32 %v246, %v247
    %s249 = vtos %v248
    %v250 = vlaneseq
    %v251 = vshrl.u32 %v250, 7
    %v252 = vlaneseq
    %v253 = vand.u32 %v252, 127
    %vm254 = vcmp.eq.s32.totalorder %v253, 0
    %vm255 = vcmp.eq.s32.totalorder %v253, 1
    %vm256 = vcmp.eq.s32.totalorder %v253, 2
    %vm257 = vcmp.eq.s32.totalorder %v253, 3
    %v258 = vstv %s249
    %v259 = vsel %vm257, %v258, 0.0
    %v260 = vstv %s225
    %v261 = vsel %vm256, %v260, %v259
    %v262 = vstv %s201
    %v263 = vsel %vm255, %v262, %v261
    %v264 = vstv %s177
    %v265 = vsel %vm254, %v264, %v263
    %vm266 = vcmp.eq.s32.totalorder %v251, 0
    %v267 = vsel %vm266, %v265, 0.0
    %268 = vst [vmem:[#allocation7] sm:$0xff] %v267
    // Predicated region
    $region18: #{tpu_custom_call.1} parent=1 // pred_check
      _
    $region19: #{tpu_custom_call.1} parent=1 // pred_check_branch
      %270 = sbr.rel (0) target = $region21
    $region20: #{tpu_custom_call.1} parent=1 // pred_region
      %s272 = ssub.s32 128, 128
      %273 = vsyncadd [#allocation4], %s272
      %s275 = sshll.u32 [#allocation7], 4
      %s276 = int_to_ptr.vmem [resolvable:$true] %s275
      %278 = dma.vmem_to_hbm [thread:$0]  %s276, 128, %s2, [#allocation4]
    $region21: #{tpu_custom_call.1} parent=1 // pred_fallthru
      _
    // Predicated region
    $region22: #{tpu_custom_call.1} parent=1 // pred_check
      _
    $region23: #{tpu_custom_call.1} parent=1 // pred_check_branch
      %280 = sbr.rel (0) target = $region25
    $region24: #{tpu_custom_call.1} parent=1 // pred_region
      %281 = dma.done [#allocation4], 128
    $region25: #{tpu_custom_call.1} parent=1 // pred_fallthru
      _
    %282 = vsyncpa [#allocation3], 1
    %283 = vsyncpa [#allocation6], 1
    %284 = vsyncpa [#allocation4], 1

</llo_original>
